<compile_context>
chip_gen: v6e
topology: v6e:2x2x1
jax: 0.10.0
libtpu: 0.0.40
codegen_flags: <defaults>
</compile_context>

<pallas_src>
import functools

import jax
import jax.numpy as jnp
from jax.experimental import pallas as pl
from jax.experimental.pallas import tpu as pltpu


_LANE = 128


def _se_attention(pooled_f32, w1t_ref, w2_ref):
    """Squeeze-excite MLP on the VPU: pooled (Bt, C, 1) f32 -> attn (Bt, C, 1) f32."""
    w1t = w1t_ref[...].astype(jnp.float32)          # (C, Cr)  (W1 transposed)
    w2 = w2_ref[...].astype(jnp.float32)            # (C, Cr)
    # hidden[b, j] = relu(sum_i W1[j, i] * pooled[b, i])   -> sublane reduction
    hidden = jnp.sum(w1t[None, :, :] * pooled_f32, axis=1, keepdims=True)  # (Bt, 1, Cr)
    hidden = jnp.maximum(hidden, 0.0)
    # logits[b, i] = sum_j W2[i, j] * hidden[b, j]          -> lane reduction
    logits = jnp.sum(w2[None, :, :] * hidden, axis=2, keepdims=True)       # (Bt, C, 1)
    return jax.nn.sigmoid(logits)                                          # (Bt, C, 1)


def _ca_fused_kernel(x_ref, w1t_ref, w2_ref, o_ref, *, inv_hw):
    # x_ref/o_ref: (Bt, C, HWp) — whole (padded) plane resident in VMEM.
    pooled = jnp.sum(x_ref[...], axis=2, keepdims=True,
                     dtype=jnp.float32) * jnp.float32(inv_hw)   # (Bt, C, 1)
    attn = _se_attention(pooled, w1t_ref, w2_ref)               # (Bt, C, 1) f32
    # Re-read x and multiply in the input dtype (no live f32 plane copy).
    o_ref[...] = x_ref[...] * attn.astype(o_ref.dtype)


def _pool_se_kernel(x_ref, w1t_ref, w2_ref, attn_ref, acc_ref, *, inv_hw):
    # Pass 1: accumulate the spatial sum over lane-dense HW tiles; compute the
    # attention vector under pl.when on the last tile.
    k = pl.program_id(1)

    @pl.when(k == 0)
    def _init():
        acc_ref[...] = jnp.zeros_like(acc_ref)

    acc_ref[...] += jnp.sum(x_ref[...], axis=2, keepdims=True, dtype=jnp.float32)

    @pl.when(k == pl.num_programs(1) - 1)
    def _finalize():
        pooled = acc_ref[...] * jnp.float32(inv_hw)             # (Bt, C, 1)
        attn_ref[...] = _se_attention(pooled, w1t_ref, w2_ref)


def _scale_kernel(attn_ref, x_ref, o_ref):
    # Pass 2: out = x * attn, broadcast over the lane (spatial) axis,
    # multiply in the input dtype.
    o_ref[...] = x_ref[...] * attn_ref[...].astype(o_ref.dtype)


def _choose_hw_tiling(HW, C, itemsize, target_tile_bytes):
    """Pick (hw_tile, hw_pad, n_hw): lane-dense, VMEM-bounded spatial tiles."""
    hw_pad = -(-HW // _LANE) * _LANE
    max_lanes = max(_LANE, (target_tile_bytes // (C * itemsize)) // _LANE * _LANE)
    if hw_pad <= max_lanes:
        return hw_pad, hw_pad, 1
    n_blocks = hw_pad // _LANE
    max_blocks = max_lanes // _LANE
    # Prefer an exact divisor (no extra pad traffic); fall back to padding up
    # when the factorization would force many tiny grid steps.
    best = max(d for d in range(1, max_blocks + 1) if n_blocks % d == 0)
    if 2 * best >= max_blocks:
        hw_tile = best * _LANE
    else:
        hw_tile = max_lanes
        hw_pad = -(-hw_pad // hw_tile) * hw_tile
    return hw_tile, hw_pad, hw_pad // hw_tile


def _choose_bt(B, bytes_per_plane, target_tile_bytes, min_step_bytes=256 * 1024):
    """Batch planes per grid step (fused path): largest divisor of B whose tile
    fits the budget, then split further (respecting a per-step floor) so the
    grid has a few steps for pipeline overlap and megacore sharding."""
    divisors = [d for d in range(1, B + 1) if B % d == 0]
    fitting = [d for d in divisors if d * bytes_per_plane <= target_tile_bytes]
    if not fitting:
        return 1
    bt = max(fitting)
    for min_steps in (4, 2):
        for d in sorted(fitting, reverse=True):
            if B // d >= min_steps and d * bytes_per_plane >= min_step_bytes:
                return d
    return bt


def channel_attention(x_nchw, w1, w2, *, target_tile_bytes=2 * 1024 * 1024):
    """Pallas CA forward. x: (B, C, H, W); w1: (C//r, C); w2: (C, C//r)."""
    B, C, H, W = x_nchw.shape
    Cr = w1.shape[0]
    HW = H * W
    itemsize = jnp.dtype(x_nchw.dtype).itemsize

    hw_tile, hw_pad, n_hw = _choose_hw_tiling(HW, C, itemsize, target_tile_bytes)
    if n_hw == 1:
        bt = _choose_bt(B, C * hw_tile * itemsize, target_tile_bytes)
    else:
        bt = 1
    n_b = B // bt

    x_flat = x_nchw.reshape(B, C, HW)
    if hw_pad != HW:
        # Zero padding does not perturb the pooled sum (we divide by true HW).
        x_flat = jnp.pad(x_flat, ((0, 0), (0, 0), (0, hw_pad - HW)))

    w1t = jnp.transpose(w1)          # (C, Cr): avoids any in-kernel transpose
    inv_hw = 1.0 / float(HW)
    weight_bytes = 2 * C * Cr * jnp.dtype(w1.dtype).itemsize

    if n_hw == 1:
        # Whole (padded) plane fits one budgeted tile: single fused pass, each
        # grid step covers `bt` batch elements.
        out_flat = pl.pallas_call(
            functools.partial(_ca_fused_kernel, inv_hw=inv_hw),
            out_shape=jax.ShapeDtypeStruct((B, C, hw_pad), x_nchw.dtype),
            grid_spec=pltpu.PrefetchScalarGridSpec(
                num_scalar_prefetch=0,
                grid=(n_b,),
                in_specs=[
                    pl.BlockSpec((bt, C, hw_tile), lambda b: (b, 0, 0)),
                    pl.BlockSpec((C, Cr), lambda b: (0, 0)),
                    pl.BlockSpec((C, Cr), lambda b: (0, 0)),
                ],
                out_specs=pl.BlockSpec((bt, C, hw_tile), lambda b: (b, 0, 0)),
            ),
            compiler_params=pltpu.CompilerParams(
                dimension_semantics=("parallel",)),
            cost_estimate=pl.CostEstimate(
                flops=2 * B * C * hw_pad + 4 * B * C * Cr,
                transcendentals=B * C,
                bytes_accessed=2 * B * C * hw_pad * itemsize + weight_bytes),
        )(x_flat, w1t, w2)
    else:
        # Two-pass reduce-then-scale: bounded VMEM for large H*W (v7x-safe).
        attn = pl.pallas_call(
            functools.partial(_pool_se_kernel, inv_hw=inv_hw),
            out_shape=jax.ShapeDtypeStruct((B, C, 1), jnp.float32),
            grid_spec=pltpu.PrefetchScalarGridSpec(
                num_scalar_prefetch=0,
                grid=(n_b, n_hw),
                in_specs=[
                    pl.BlockSpec((bt, C, hw_tile), lambda b, k: (b, 0, k)),
                    pl.BlockSpec((C, Cr), lambda b, k: (0, 0)),
                    pl.BlockSpec((C, Cr), lambda b, k: (0, 0)),
                ],
                out_specs=pl.BlockSpec((bt, C, 1), lambda b, k: (b, 0, 0)),
                scratch_shapes=[pltpu.VMEM((bt, C, 1), jnp.float32)],
            ),
            compiler_params=pltpu.CompilerParams(
                dimension_semantics=("parallel", "arbitrary")),
            cost_estimate=pl.CostEstimate(
                flops=B * C * hw_pad + 4 * B * C * Cr,
                transcendentals=B * C,
                bytes_accessed=B * C * hw_pad * itemsize + weight_bytes + B * C * 4),
        )(x_flat, w1t, w2)

        out_flat = pl.pallas_call(
            _scale_kernel,
            out_shape=jax.ShapeDtypeStruct((B, C, hw_pad), x_nchw.dtype),
            grid_spec=pltpu.PrefetchScalarGridSpec(
                num_scalar_prefetch=0,
                grid=(n_b, n_hw),
                in_specs=[
                    pl.BlockSpec((bt, C, 1), lambda b, k: (b, 0, 0)),
                    pl.BlockSpec((bt, C, hw_tile), lambda b, k: (b, 0, k)),
                ],
                out_specs=pl.BlockSpec((bt, C, hw_tile), lambda b, k: (b, 0, k)),
            ),
            compiler_params=pltpu.CompilerParams(
                dimension_semantics=("parallel", "parallel")),
            cost_estimate=pl.CostEstimate(
                flops=B * C * hw_pad,
                transcendentals=0,
                bytes_accessed=2 * B * C * hw_pad * itemsize + B * C * 4),
        )(attn, x_flat)

    if hw_pad != HW:
        out_flat = out_flat[:, :, :HW]
    return out_flat.reshape(B, C, H, W)


def channel_attention_ref(x, w1, w2):
    # Plain-JAX reference mirroring the PyTorch forward (NCHW).
    pooled = jnp.mean(x.astype(jnp.float32), axis=(2, 3))          # (B, C)
    hidden = jnp.maximum(pooled @ w1.astype(jnp.float32).T, 0.0)   # (B, Cr)
    attn = jax.nn.sigmoid(hidden @ w2.astype(jnp.float32).T)       # (B, C)
    return (x.astype(jnp.float32) * attn[:, :, None, None]).astype(x.dtype)


if __name__ == "__main__":
    # planes=64, reduction=16 -> hidden=4 (module defaults), small spatial size.
    B, C, H, W = 2, 64, 16, 16
    reduction = 16
    Cr = C // reduction

    key = jax.random.PRNGKey(0)
    kx, k1, k2 = jax.random.split(key, 3)
    x = jax.random.normal(kx, (B, C, H, W), dtype=jnp.float32)
    # 1x1 conv weights (out, in, 1, 1) squeezed to (out, in); no bias.
    w1 = jax.random.normal(k1, (Cr, C), dtype=jnp.float32) * 0.1
    w2 = jax.random.normal(k2, (C, Cr), dtype=jnp.float32) * 0.1

    ref = channel_attention_ref(x, w1, w2)

    # Fused single-pass path (whole plane in one VMEM tile, batched per step).
    out = jax.block_until_ready(channel_attention(x, w1, w2))
    assert out.shape == (B, C, H, W)
    assert jnp.allclose(out, ref, atol=1e-5, rtol=1e-5), "fused path mismatch"

    # Force the two-pass (reduce-then-scale) path with small HW tiles.
    out2 = jax.block_until_ready(
        channel_attention(x, w1, w2, target_tile_bytes=C * _LANE * 4))
    assert jnp.allclose(out2, ref, atol=1e-5, rtol=1e-5), "two-pass path mismatch"

    # Non-multiple-of-128 spatial size exercises the lane padding.
    x3 = jax.random.normal(kx, (B, C, 10, 10), dtype=jnp.float32)
    out3 = jax.block_until_ready(channel_attention(x3, w1, w2))
    assert jnp.allclose(out3, channel_attention_ref(x3, w1, w2),
                        atol=1e-5, rtol=1e-5), "padded path mismatch"

    print("KERNEL_OK")
</pallas_src>

<mosaic_0001>
module attributes {stable_mosaic.version = 11 : i64} {
  func.func @_ca_fused_kernel(%arg0: i32, %arg1: memref<2x64x256xf32, #tpu.memory_space<vmem>>, %arg2: memref<64x4xf32, #tpu.memory_space<vmem>>, %arg3: memref<64x4xf32, #tpu.memory_space<vmem>>, %arg4: memref<2x64x256xf32, #tpu.memory_space<vmem>>) attributes {dimension_semantics = [#tpu.dimension_semantics<parallel>], iteration_bounds = array<i64: 1>, scalar_prefetch = 0 : i64, scratch_operands = 0 : i64, tpu.core_type = #tpu.core_type<tc>, window_params = [{transform_indices = @transform_0, window_bounds = array<i64: 2, 64, 256>}, {pipeline_mode = #tpu.pipeline_mode<synchronous>, transform_indices = @transform_1, window_bounds = array<i64: 64, 4>}, {pipeline_mode = #tpu.pipeline_mode<synchronous>, transform_indices = @transform_2, window_bounds = array<i64: 64, 4>}, {transform_indices = @transform_3, window_bounds = array<i64: 2, 64, 256>}]} {
    %c0 = arith.constant 0 : index
    %c0_0 = arith.constant 0 : index
    %c0_1 = arith.constant 0 : index
    %0 = vector.load %arg1[%c0, %c0_0, %c0_1] : memref<2x64x256xf32, #tpu.memory_space<vmem>>, vector<2x64x256xf32>
    %cst = arith.constant dense<0.000000e+00> : vector<2x64xf32>
    %1 = vector.multi_reduction <add>, %0, %cst [2] : vector<2x64x256xf32> to vector<2x64xf32>
    %2 = vector.shape_cast %1 : vector<2x64xf32> to vector<2x64x1xf32>
    %cst_2 = arith.constant 3.906250e-03 : f32
    %3 = vector.broadcast %cst_2 : f32 to vector<2x64x1xf32>
    %4 = arith.mulf %2, %3 : vector<2x64x1xf32>
    %c0_3 = arith.constant 0 : index
    %c0_4 = arith.constant 0 : index
    %5 = vector.load %arg2[%c0_3, %c0_4] : memref<64x4xf32, #tpu.memory_space<vmem>>, vector<64x4xf32>
    %c0_5 = arith.constant 0 : index
    %c0_6 = arith.constant 0 : index
    %6 = vector.load %arg3[%c0_5, %c0_6] : memref<64x4xf32, #tpu.memory_space<vmem>>, vector<64x4xf32>
    %7 = vector.shape_cast %5 : vector<64x4xf32> to vector<1x64x4xf32>
    %8 = vector.broadcast %7 : vector<1x64x4xf32> to vector<2x64x4xf32>
    %9 = vector.broadcast %4 : vector<2x64x1xf32> to vector<2x64x4xf32>
    %10 = arith.mulf %8, %9 : vector<2x64x4xf32>
    %cst_7 = arith.constant dense<0.000000e+00> : vector<2x4xf32>
    %11 = vector.multi_reduction <add>, %10, %cst_7 [1] : vector<2x64x4xf32> to vector<2x4xf32>
    %12 = vector.shape_cast %11 : vector<2x4xf32> to vector<2x1x4xf32>
    %cst_8 = arith.constant 0.000000e+00 : f32
    %13 = vector.broadcast %cst_8 : f32 to vector<2x1x4xf32>
    %14 = arith.maximumf %12, %13 : vector<2x1x4xf32>
    %15 = vector.shape_cast %6 : vector<64x4xf32> to vector<1x64x4xf32>
    %16 = vector.broadcast %15 : vector<1x64x4xf32> to vector<2x64x4xf32>
    %17 = vector.broadcast %14 : vector<2x1x4xf32> to vector<2x64x4xf32>
    %18 = arith.mulf %16, %17 : vector<2x64x4xf32>
    %cst_9 = arith.constant dense<0.000000e+00> : vector<2x64xf32>
    %19 = vector.multi_reduction <add>, %18, %cst_9 [2] : vector<2x64x4xf32> to vector<2x64xf32>
    %20 = vector.shape_cast %19 : vector<2x64xf32> to vector<2x64x1xf32>
    %21 = arith.negf %20 : vector<2x64x1xf32>
    %22 = math.exp %21 : vector<2x64x1xf32>
    %cst_10 = arith.constant 1.000000e+00 : f32
    %23 = vector.broadcast %cst_10 : f32 to vector<2x64x1xf32>
    %24 = arith.addf %23, %22 : vector<2x64x1xf32>
    %25 = arith.divf %23, %24 : vector<2x64x1xf32>
    %c0_11 = arith.constant 0 : index
    %c0_12 = arith.constant 0 : index
    %c0_13 = arith.constant 0 : index
    %26 = vector.load %arg1[%c0_11, %c0_12, %c0_13] : memref<2x64x256xf32, #tpu.memory_space<vmem>>, vector<2x64x256xf32>
    %27 = vector.broadcast %25 : vector<2x64x1xf32> to vector<2x64x256xf32>
    %28 = arith.mulf %26, %27 : vector<2x64x256xf32>
    %c0_14 = arith.constant 0 : index
    %c0_15 = arith.constant 0 : index
    %c0_16 = arith.constant 0 : index
    %29 = vector.load %arg4[%c0_14, %c0_15, %c0_16] : memref<2x64x256xf32, #tpu.memory_space<vmem>>, vector<2x64x256xf32>
    tpu.vector_store %arg4[%c0_14, %c0_15, %c0_16], %28 {strides = array<i32>} : memref<2x64x256xf32, #tpu.memory_space<vmem>>, vector<2x64x256xf32>,
    return
  }
  func.func @transform_0(%arg0: i32) -> (i32, i32, i32) {
    %c0_i32 = arith.constant 0 : i32
    %c0_i32_0 = arith.constant 0 : i32
    %c0_i32_1 = arith.constant 0 : i32
    return %arg0, %c0_i32, %c0_i32_0 : i32, i32, i32
  }
  func.func @transform_1(%arg0: i32) -> (i32, i32) {
    %c0_i32 = arith.constant 0 : i32
    %c0_i32_0 = arith.constant 0 : i32
    %c0_i32_1 = arith.constant 0 : i32
    return %c0_i32, %c0_i32_0 : i32, i32
  }
  func.func @transform_2(%arg0: i32) -> (i32, i32) {
    %c0_i32 = arith.constant 0 : i32
    %c0_i32_0 = arith.constant 0 : i32
    %c0_i32_1 = arith.constant 0 : i32
    return %c0_i32, %c0_i32_0 : i32, i32
  }
  func.func @transform_3(%arg0: i32) -> (i32, i32, i32) {
    %c0_i32 = arith.constant 0 : i32
    %c0_i32_0 = arith.constant 0 : i32
    %c0_i32_1 = arith.constant 0 : i32
    return %arg0, %c0_i32, %c0_i32_0 : i32, i32, i32
  }
}

</mosaic_0001>

<llo_original>
// kernel: tpu_custom_call.1
$region0: #{tpu_custom_call.1}
  #allocation0 [shape = 'u32[]', space=smem, size = 0x4, offset = 0x4, fixed_abs, tag = 'smem constant byte address 0x4 - core index']
  #allocation1 [shape = 'u32[144,128]{1,0:T(1,128)}', space=vmem, size = 0x12000, scoped, tag = 'internal scratch']
  %s0 = inlined_call_operand.hbm [shape: f32[2,64,256], index: 0, kind: input, shape index: {}]
  %s1 = inlined_call_operand.vmem [shape: f32[64,4], index: 1, kind: input, shape index: {}]
  %s2 = inlined_call_operand.vmem [shape: f32[64,4], index: 2, kind: input, shape index: {}]
  %s3 = inlined_call_operand.hbm [shape: f32[2,64,256], index: 3, kind: output, shape index: {}]
  %s4 = sld [smem:[#allocation0]]
  $region26: #{tpu_custom_call.1} parent=0
    _
  %s6 = ssub.s32 1, %s4
  %s7 = scalar_select 0, %s6, %s4
  $region1: #{tpu_custom_call.1} parent=0
    #allocation2 [shape = 'u8[131072]{0}', space=vmem, size = 0x20000, scoped, tag = 'input window, operand 0, single buffered']
    #allocation3 [shape = 's32[1]{0}', space=sflag, size = 0x4, scoped, tag = 'scoped memory for tpu_custom_call.1']
    #allocation4 [shape = 's32[1]{0}', space=sflag, size = 0x4, scoped, tag = 'scoped memory for tpu_custom_call.1']
    #allocation5 [shape = 'u8[131072]{0}', space=vmem, size = 0x20000, scoped, tag = 'output window, operand 0, single buffered']
    %8 = vsyncpa [#allocation3], 0
    %9 = vsyncpa [#allocation4], 0
    // Predicated region
    $region2: #{tpu_custom_call.1} parent=1 // pred_check
      _
    $region3: #{tpu_custom_call.1} parent=1 // pred_check_branch
      %11 = sbr.rel (0) target = $region5
    $region4: #{tpu_custom_call.1} parent=1 // pred_region
      %s13 = ssub.s32 4096, 4096
      %14 = vsyncadd [#allocation3], %s13
      %s15 = sshll.u32 [#allocation2], 4
      %s16 = int_to_ptr.vmem [resolvable:$true] %s15
      %21 = dma.hbm_to_vmem [thread:$0]  %s0, 4096, %s16, [#allocation3], 256, 256, 16
    $region5: #{tpu_custom_call.1} parent=1 // pred_fallthru
      _
    // Predicated region
    $region6: #{tpu_custom_call.1} parent=1 // pred_check
      _
    $region7: #{tpu_custom_call.1} parent=1 // pred_check_branch
      %23 = sbr.rel (0) target = $region9
    $region8: #{tpu_custom_call.1} parent=1 // pred_region
      _
    $region9: #{tpu_custom_call.1} parent=1 // pred_fallthru
      _
    // Predicated region
    $region10: #{tpu_custom_call.1} parent=1 // pred_check
      _
    $region11: #{tpu_custom_call.1} parent=1 // pred_check_branch
      %25 = sbr.rel (0) target = $region13
    $region12: #{tpu_custom_call.1} parent=1 // pred_region
      _
    $region13: #{tpu_custom_call.1} parent=1 // pred_fallthru
      _
    // Predicated region
    $region14: #{tpu_custom_call.1} parent=1 // pred_check
      _
    $region15: #{tpu_custom_call.1} parent=1 // pred_check_branch
      %27 = sbr.rel (0) target = $region17
    $region16: #{tpu_custom_call.1} parent=1 // pred_region
      %28 = dma.done [#allocation3], 4096
    $region17: #{tpu_custom_call.1} parent=1 // pred_fallthru
      _
    %v29 = vld [vmem:[#allocation2] sm:$0xff]
    %v30 = vld [vmem:[#allocation2 + $0x8] sm:$0xff]
    %v31 = vld [vmem:[#allocation2 + $0x10] sm:$0xff]
    %v32 = vld [vmem:[#allocation2 + $0x18] sm:$0xff]
    %v33 = vld [vmem:[#allocation2 + $0x20] sm:$0xff]
    %v34 = vld [vmem:[#allocation2 + $0x28] sm:$0xff]
    %v35 = vld [vmem:[#allocation2 + $0x30] sm:$0xff]
    %v36 = vld [vmem:[#allocation2 + $0x38] sm:$0xff]
    %v37 = vld [vmem:[#allocation2 + $0x40] sm:$0xff]
    %v38 = vld [vmem:[#allocation2 + $0x48] sm:$0xff]
    %v39 = vld [vmem:[#allocation2 + $0x50] sm:$0xff]
    %v40 = vld [vmem:[#allocation2 + $0x58] sm:$0xff]
    %v41 = vld [vmem:[#allocation2 + $0x60] sm:$0xff]
    %v42 = vld [vmem:[#allocation2 + $0x68] sm:$0xff]
    %v43 = vld [vmem:[#allocation2 + $0x70] sm:$0xff]
    %v44 = vld [vmem:[#allocation2 + $0x78] sm:$0xff]
    %v45 = vld [vmem:[#allocation2 + $0x80] sm:$0xff]
    %v46 = vld [vmem:[#allocation2 + $0x88] sm:$0xff]
    %v47 = vld [vmem:[#allocation2 + $0x90] sm:$0xff]
    %v48 = vld [vmem:[#allocation2 + $0x98] sm:$0xff]
    %v49 = vld [vmem:[#allocation2 + $0xa0] sm:$0xff]
    %v50 = vld [vmem:[#allocation2 + $0xa8] sm:$0xff]
    %v51 = vld [vmem:[#allocation2 + $0xb0] sm:$0xff]
    %v52 = vld [vmem:[#allocation2 + $0xb8] sm:$0xff]
    %v53 = vld [vmem:[#allocation2 + $0xc0] sm:$0xff]
    %v54 = vld [vmem:[#allocation2 + $0xc8] sm:$0xff]
    %v55 = vld [vmem:[#allocation2 + $0xd0] sm:$0xff]
    %v56 = vld [vmem:[#allocation2 + $0xd8] sm:$0xff]
    %v57 = vld [vmem:[#allocation2 + $0xe0] sm:$0xff]
    %v58 = vld [vmem:[#allocation2 + $0xe8] sm:$0xff]
    %v59 = vld [vmem:[#allocation2 + $0xf0] sm:$0xff]
    %v60 = vld [vmem:[#allocation2 + $0xf8] sm:$0xff]
    %v61 = vadd.f32 %v29, %v30
    %62 = vadd.xlane.f32.xlu0 %v61
    %v63 = vpop.xlane.xlu0 %62
    %v64 = vadd.f32 %v31, %v32
    %65 = vadd.xlane.f32.xlu0 %v64
    %v66 = vpop.xlane.xlu0 %65
    %v67 = vadd.f32 %v33, %v34
    %68 = vadd.xlane.f32.xlu0 %v67
    %v69 = vpop.xlane.xlu0 %68
    %v70 = vadd.f32 %v35, %v36
    %71 = vadd.xlane.f32.xlu0 %v70
    %v72 = vpop.xlane.xlu0 %71
    %v73 = vadd.f32 %v37, %v38
    %74 = vadd.xlane.f32.xlu0 %v73
    %v75 = vpop.xlane.xlu0 %74
    %v76 = vadd.f32 %v39, %v40
    %77 = vadd.xlane.f32.xlu0 %v76
    %v78 = vpop.xlane.xlu0 %77
    %v79 = vadd.f32 %v41, %v42
    %80 = vadd.xlane.f32.xlu0 %v79
    %v81 = vpop.xlane.xlu0 %80
    %v82 = vadd.f32 %v43, %v44
    %83 = vadd.xlane.f32.xlu0 %v82
    %v84 = vpop.xlane.xlu0 %83
    %v85 = vadd.f32 %v45, %v46
    %86 = vadd.xlane.f32.xlu0 %v85
    %v87 = vpop.xlane.xlu0 %86
    %v88 = vadd.f32 %v47, %v48
    %89 = vadd.xlane.f32.xlu0 %v88
    %v90 = vpop.xlane.xlu0 %89
    %v91 = vadd.f32 %v49, %v50
    %92 = vadd.xlane.f32.xlu0 %v91
    %v93 = vpop.xlane.xlu0 %92
    %v94 = vadd.f32 %v51, %v52
    %95 = vadd.xlane.f32.xlu0 %v94
    %v96 = vpop.xlane.xlu0 %95
    %v97 = vadd.f32 %v53, %v54
    %98 = vadd.xlane.f32.xlu0 %v97
    %v99 = vpop.xlane.xlu0 %98
    %v100 = vadd.f32 %v55, %v56
    %101 = vadd.xlane.f32.xlu0 %v100
    %v102 = vpop.xlane.xlu0 %101
    %v103 = vadd.f32 %v57, %v58
    %104 = vadd.xlane.f32.xlu0 %v103
    %v105 = vpop.xlane.xlu0 %104
    %v106 = vadd.f32 %v59, %v60
    %107 = vadd.xlane.f32.xlu0 %v106
    %v108 = vpop.xlane.xlu0 %107
    %v109 = vmul.f32 %v63, 0.00390625
    %v110 = vmul.f32 %v66, 0.00390625
    %v111 = vmul.f32 %v69, 0.00390625
    %v112 = vmul.f32 %v72, 0.00390625
    %v113 = vmul.f32 %v75, 0.00390625
    %v114 = vmul.f32 %v78, 0.00390625
    %v115 = vmul.f32 %v81, 0.00390625
    %v116 = vmul.f32 %v84, 0.00390625
    %v117 = vmul.f32 %v87, 0.00390625
    %v118 = vmul.f32 %v90, 0.00390625
    %v119 = vmul.f32 %v93, 0.00390625
    %v120 = vmul.f32 %v96, 0.00390625
    %v121 = vmul.f32 %v99, 0.00390625
    %v122 = vmul.f32 %v102, 0.00390625
    %v123 = vmul.f32 %v105, 0.00390625
    %v124 = vmul.f32 %v108, 0.00390625
    %v125 = vld [vmem:[%s1] sm:$0xff]
    %v126 = vld [vmem:[%s1 + $0x8] sm:$0xff]
    %v127 = vld [vmem:[%s1 + $0x10] sm:$0xff]
    %v128 = vld [vmem:[%s1 + $0x18] sm:$0xff]
    %v129 = vld [vmem:[%s1 + $0x20] sm:$0xff]
    %v130 = vld [vmem:[%s1 + $0x28] sm:$0xff]
    %v131 = vld [vmem:[%s1 + $0x30] sm:$0xff]
    %v132 = vld [vmem:[%s1 + $0x38] sm:$0xff]
    %v133 = vld [vmem:[%s2] sm:$0xff]
    %v134 = vld [vmem:[%s2 + $0x8] sm:$0xff]
    %v135 = vld [vmem:[%s2 + $0x10] sm:$0xff]
    %v136 = vld [vmem:[%s2 + $0x18] sm:$0xff]
    %v137 = vld [vmem:[%s2 + $0x20] sm:$0xff]
    %v138 = vld [vmem:[%s2 + $0x28] sm:$0xff]
    %v139 = vld [vmem:[%s2 + $0x30] sm:$0xff]
    %v140 = vld [vmem:[%s2 + $0x38] sm:$0xff]
    %v141 = vmul.f32 %v125, %v109
    %v142 = vmul.f32 %v126, %v110
    %v143 = vmul.f32 %v127, %v111
    %v144 = vmul.f32 %v128, %v112
    %v145 = vmul.f32 %v129, %v113
    %v146 = vmul.f32 %v130, %v114
    %v147 = vmul.f32 %v131, %v115
    %v148 = vmul.f32 %v132, %v116
    %v149 = vmul.f32 %v125, %v117
    %v150 = vmul.f32 %v126, %v118
    %v151 = vmul.f32 %v127, %v119
    %v152 = vmul.f32 %v128, %v120
    %v153 = vmul.f32 %v129, %v121
    %v154 = vmul.f32 %v130, %v122
    %v155 = vmul.f32 %v131, %v123
    %v156 = vmul.f32 %v132, %v124
    %vm157 = vcmask 31744
    %v158 = vsel %vm157, %v141, 0.0
    %v159 = vsel %vm157, %v142, 0.0
    %v160 = vadd.f32 %v158, %v159
    %v161 = vsel %vm157, %v143, 0.0
    %v162 = vadd.f32 %v160, %v161
    %v163 = vsel %vm157, %v144, 0.0
    %v164 = vadd.f32 %v162, %v163
    %v165 = vsel %vm157, %v145, 0.0
    %v166 = vadd.f32 %v164, %v165
    %v167 = vsel %vm157, %v146, 0.0
    %v168 = vadd.f32 %v166, %v167
    %v169 = vsel %vm157, %v147, 0.0
    %v170 = vadd.f32 %v168, %v169
    %v171 = vsel %vm157, %v148, 0.0
    %v172 = vadd.f32 %v170, %v171
    %v173 = vrot.slane %v172, 4
    %v174 = vadd.f32 %v172, %v173
    %v175 = vrot.slane %v174, 2
    %v176 = vadd.f32 %v174, %v175
    %v177 = vrot.slane %v176, 1
    %v178 = vadd.f32 %v176, %v177
    %v179 = vsel %vm157, %v149, 0.0
    %v180 = vsel %vm157, %v150, 0.0
    %v181 = vadd.f32 %v179, %v180
    %v182 = vsel %vm157, %v151, 0.0
    %v183 = vadd.f32 %v181, %v182
    %v184 = vsel %vm157, %v152, 0.0
    %v185 = vadd.f32 %v183, %v184
    %v186 = vsel %vm157, %v153, 0.0
    %v187 = vadd.f32 %v185, %v186
    %v188 = vsel %vm157, %v154, 0.0
    %v189 = vadd.f32 %v187, %v188
    %v190 = vsel %vm157, %v155, 0.0
    %v191 = vadd.f32 %v189, %v190
    %v192 = vsel %vm157, %v156, 0.0
    %v193 = vadd.f32 %v191, %v192
    %v194 = vrot.slane %v193, 4
    %v195 = vadd.f32 %v193, %v194
    %v196 = vrot.slane %v195, 2
    %v197 = vadd.f32 %v195, %v196
    %v198 = vrot.slane %v197, 1
    %v199 = vadd.f32 %v197, %v198
    %v200 = vmax.f32 %v178, 0.0
    %v201 = vmax.f32 %v199, 0.0
    %v202 = vmul.f32 %v133, %v200
    %v203 = vmul.f32 %v134, %v200
    %v204 = vmul.f32 %v135, %v200
    %v205 = vmul.f32 %v136, %v200
    %v206 = vmul.f32 %v137, %v200
    %v207 = vmul.f32 %v138, %v200
    %v208 = vmul.f32 %v139, %v200
    %v209 = vmul.f32 %v140, %v200
    %v210 = vmul.f32 %v133, %v201
    %v211 = vmul.f32 %v134, %v201
    %v212 = vmul.f32 %v135, %v201
    %v213 = vmul.f32 %v136, %v201
    %v214 = vmul.f32 %v137, %v201
    %v215 = vmul.f32 %v138, %v201
    %v216 = vmul.f32 %v139, %v201
    %v217 = vmul.f32 %v140, %v201
    %v218 = vsel %vm157, %v202, 0.0
    %219 = vadd.xlane.f32.xlu0 %v218
    %v220 = vpop.xlane.xlu0 %219
    %v221 = vsel %vm157, %v203, 0.0
    %222 = vadd.xlane.f32.xlu0 %v221
    %v223 = vpop.xlane.xlu0 %222
    %v224 = vsel %vm157, %v204, 0.0
    %225 = vadd.xlane.f32.xlu0 %v224
    %v226 = vpop.xlane.xlu0 %225
    %v227 = vsel %vm157, %v205, 0.0
    %228 = vadd.xlane.f32.xlu0 %v227
    %v229 = vpop.xlane.xlu0 %228
    %v230 = vsel %vm157, %v206, 0.0
    %231 = vadd.xlane.f32.xlu0 %v230
    %v232 = vpop.xlane.xlu0 %231
    %v233 = vsel %vm157, %v207, 0.0
    %234 = vadd.xlane.f32.xlu0 %v233
    %v235 = vpop.xlane.xlu0 %234
    %v236 = vsel %vm157, %v208, 0.0
    %237 = vadd.xlane.f32.xlu0 %v236
    %v238 = vpop.xlane.xlu0 %237
    %v239 = vsel %vm157, %v209, 0.0
    %240 = vadd.xlane.f32.xlu0 %v239
    %v241 = vpop.xlane.xlu0 %240
    %v242 = vsel %vm157, %v210, 0.0
    %243 = vadd.xlane.f32.xlu0 %v242
    %v244 = vpop.xlane.xlu0 %243
    %v245 = vsel %vm157, %v211, 0.0
    %246 = vadd.xlane.f32.xlu0 %v245
    %v247 = vpop.xlane.xlu0 %246
    %v248 = vsel %vm157, %v212, 0.0
    %249 = vadd.xlane.f32.xlu0 %v248
    %v250 = vpop.xlane.xlu0 %249
    %v251 = vsel %vm157, %v213, 0.0
    %252 = vadd.xlane.f32.xlu0 %v251
    %v253 = vpop.xlane.xlu0 %252
    %v254 = vsel %vm157, %v214, 0.0
    %255 = vadd.xlane.f32.xlu0 %v254
    %v256 = vpop.xlane.xlu0 %255
    %v257 = vsel %vm157, %v215, 0.0
    %258 = vadd.xlane.f32.xlu0 %v257
    %v259 = vpop.xlane.xlu0 %258
    %v260 = vsel %vm157, %v216, 0.0
    %261 = vadd.xlane.f32.xlu0 %v260
    %v262 = vpop.xlane.xlu0 %261
    %v263 = vsel %vm157, %v217, 0.0
    %264 = vadd.xlane.f32.xlu0 %v263
    %v265 = vpop.xlane.xlu0 %264
    %v266 = vxor.u32 %v220, 2147483648
    %v267 = vxor.u32 %v223, 2147483648
    %v268 = vxor.u32 %v226, 2147483648
    %v269 = vxor.u32 %v229, 2147483648
    %v270 = vxor.u32 %v232, 2147483648
    %v271 = vxor.u32 %v235, 2147483648
    %v272 = vxor.u32 %v238, 2147483648
    %v273 = vxor.u32 %v241, 2147483648
    %v274 = vxor.u32 %v244, 2147483648
    %v275 = vxor.u32 %v247, 2147483648
    %v276 = vxor.u32 %v250, 2147483648
    %v277 = vxor.u32 %v253, 2147483648
    %v278 = vxor.u32 %v256, 2147483648
    %v279 = vxor.u32 %v259, 2147483648
    %v280 = vxor.u32 %v262, 2147483648
    %v281 = vxor.u32 %v265, 2147483648
    %v282 = vmul.f32 %v266, 1.442695
    %v283 = vpow.pop %v282
    %v284 = vmul.f32 %v267, 1.442695
    %v285 = vpow.pop %v284
    %v286 = vmul.f32 %v268, 1.442695
    %v287 = vpow.pop %v286
    %v288 = vmul.f32 %v269, 1.442695
    %v289 = vpow.pop %v288
    %v290 = vmul.f32 %v270, 1.442695
    %v291 = vpow.pop %v290
    %v292 = vmul.f32 %v271, 1.442695
    %v293 = vpow.pop %v292
    %v294 = vmul.f32 %v272, 1.442695
    %v295 = vpow.pop %v294
    %v296 = vmul.f32 %v273, 1.442695
    %v297 = vpow.pop %v296
    %v298 = vmul.f32 %v274, 1.442695
    %v299 = vpow.pop %v298
    %v300 = vmul.f32 %v275, 1.442695
    %v301 = vpow.pop %v300
    %v302 = vmul.f32 %v276, 1.442695
    %v303 = vpow.pop %v302
    %v304 = vmul.f32 %v277, 1.442695
    %v305 = vpow.pop %v304
    %v306 = vmul.f32 %v278, 1.442695
    %v307 = vpow.pop %v306
    %v308 = vmul.f32 %v279, 1.442695
    %v309 = vpow.pop %v308
    %v310 = vmul.f32 %v280, 1.442695
    %v311 = vpow.pop %v310
    %v312 = vmul.f32 %v281, 1.442695
    %v313 = vpow.pop %v312
    %v314 = vadd.f32 %v283, 1.0
    %v315 = vadd.f32 %v285, 1.0
    %v316 = vadd.f32 %v287, 1.0
    %v317 = vadd.f32 %v289, 1.0
    %v318 = vadd.f32 %v291, 1.0
    %v319 = vadd.f32 %v293, 1.0
    %v320 = vadd.f32 %v295, 1.0
    %v321 = vadd.f32 %v297, 1.0
    %v322 = vadd.f32 %v299, 1.0
    %v323 = vadd.f32 %v301, 1.0
    %v324 = vadd.f32 %v303, 1.0
    %v325 = vadd.f32 %v305, 1.0
    %v326 = vadd.f32 %v307, 1.0
    %v327 = vadd.f32 %v309, 1.0
    %v328 = vadd.f32 %v311, 1.0
    %v329 = vadd.f32 %v313, 1.0
    %v330 = vrcp.pop %v314
    %v331 = vmul.f32 1.0, %v330
    %v332 = vrcp.pop %v315
    %v333 = vmul.f32 1.0, %v332
    %v334 = vrcp.pop %v316
    %v335 = vmul.f32 1.0, %v334
    %v336 = vrcp.pop %v317
    %v337 = vmul.f32 1.0, %v336
    %v338 = vrcp.pop %v318
    %v339 = vmul.f32 1.0, %v338
    %v340 = vrcp.pop %v319
    %v341 = vmul.f32 1.0, %v340
    %v342 = vrcp.pop %v320
    %v343 = vmul.f32 1.0, %v342
    %v344 = vrcp.pop %v321
    %v345 = vmul.f32 1.0, %v344
    %v346 = vrcp.pop %v322
    %v347 = vmul.f32 1.0, %v346
    %v348 = vrcp.pop %v323
    %v349 = vmul.f32 1.0, %v348
    %v350 = vrcp.pop %v324
    %v351 = vmul.f32 1.0, %v350
    %v352 = vrcp.pop %v325
    %v353 = vmul.f32 1.0, %v352
    %v354 = vrcp.pop %v326
    %v355 = vmul.f32 1.0, %v354
    %v356 = vrcp.pop %v327
    %v357 = vmul.f32 1.0, %v356
    %v358 = vrcp.pop %v328
    %v359 = vmul.f32 1.0, %v358
    %v360 = vrcp.pop %v329
    %v361 = vmul.f32 1.0, %v360
    %v362 = vmul.f32 %v29, %v331
    %v363 = vmul.f32 %v30, %v331
    %v364 = vmul.f32 %v31, %v333
    %v365 = vmul.f32 %v32, %v333
    %v366 = vmul.f32 %v33, %v335
    %v367 = vmul.f32 %v34, %v335
    %v368 = vmul.f32 %v35, %v337
    %v369 = vmul.f32 %v36, %v337
    %v370 = vmul.f32 %v37, %v339
    %v371 = vmul.f32 %v38, %v339
    %v372 = vmul.f32 %v39, %v341
    %v373 = vmul.f32 %v40, %v341
    %v374 = vmul.f32 %v41, %v343
    %v375 = vmul.f32 %v42, %v343
    %v376 = vmul.f32 %v43, %v345
    %v377 = vmul.f32 %v44, %v345
    %v378 = vmul.f32 %v45, %v347
    %v379 = vmul.f32 %v46, %v347
    %v380 = vmul.f32 %v47, %v349
    %v381 = vmul.f32 %v48, %v349
    %v382 = vmul.f32 %v49, %v351
    %v383 = vmul.f32 %v50, %v351
    %v384 = vmul.f32 %v51, %v353
    %v385 = vmul.f32 %v52, %v353
    %v386 = vmul.f32 %v53, %v355
    %v387 = vmul.f32 %v54, %v355
    %v388 = vmul.f32 %v55, %v357
    %v389 = vmul.f32 %v56, %v357
    %v390 = vmul.f32 %v57, %v359
    %v391 = vmul.f32 %v58, %v359
    %v392 = vmul.f32 %v59, %v361
    %v393 = vmul.f32 %v60, %v361
    %394 = vst [vmem:[#allocation5] sm:$0xff] %v362
    %395 = vst [vmem:[#allocation5 + $0x8] sm:$0xff] %v363
    %396 = vst [vmem:[#allocation5 + $0x10] sm:$0xff] %v364
    %397 = vst [vmem:[#allocation5 + $0x18] sm:$0xff] %v365
    %398 = vst [vmem:[#allocation5 + $0x20] sm:$0xff] %v366
    %399 = vst [vmem:[#allocation5 + $0x28] sm:$0xff] %v367
    %400 = vst [vmem:[#allocation5 + $0x30] sm:$0xff] %v368
    %401 = vst [vmem:[#allocation5 + $0x38] sm:$0xff] %v369
    %402 = vst [vmem:[#allocation5 + $0x40] sm:$0xff] %v370
    %403 = vst [vmem:[#allocation5 + $0x48] sm:$0xff] %v371
    %404 = vst [vmem:[#allocation5 + $0x50] sm:$0xff] %v372
    %405 = vst [vmem:[#allocation5 + $0x58] sm:$0xff] %v373
    %406 = vst [vmem:[#allocation5 + $0x60] sm:$0xff] %v374
    %407 = vst [vmem:[#allocation5 + $0x68] sm:$0xff] %v375
    %408 = vst [vmem:[#allocation5 + $0x70] sm:$0xff] %v376
    %409 = vst [vmem:[#allocation5 + $0x78] sm:$0xff] %v377
    %410 = vst [vmem:[#allocation5 + $0x80] sm:$0xff] %v378
    %411 = vst [vmem:[#allocation5 + $0x88] sm:$0xff] %v379
    %412 = vst [vmem:[#allocation5 + $0x90] sm:$0xff] %v380
    %413 = vst [vmem:[#allocation5 + $0x98] sm:$0xff] %v381
    %414 = vst [vmem:[#allocation5 + $0xa0] sm:$0xff] %v382
    %415 = vst [vmem:[#allocation5 + $0xa8] sm:$0xff] %v383
    %416 = vst [vmem:[#allocation5 + $0xb0] sm:$0xff] %v384
    %417 = vst [vmem:[#allocation5 + $0xb8] sm:$0xff] %v385
    %418 = vst [vmem:[#allocation5 + $0xc0] sm:$0xff] %v386
    %419 = vst [vmem:[#allocation5 + $0xc8] sm:$0xff] %v387
    %420 = vst [vmem:[#allocation5 + $0xd0] sm:$0xff] %v388
    %421 = vst [vmem:[#allocation5 + $0xd8] sm:$0xff] %v389
    %422 = vst [vmem:[#allocation5 + $0xe0] sm:$0xff] %v390
    %423 = vst [vmem:[#allocation5 + $0xe8] sm:$0xff] %v391
    %424 = vst [vmem:[#allocation5 + $0xf0] sm:$0xff] %v392
    %425 = vst [vmem:[#allocation5 + $0xf8] sm:$0xff] %v393
    // Predicated region
    $region18: #{tpu_custom_call.1} parent=1 // pred_check
      _
    $region19: #{tpu_custom_call.1} parent=1 // pred_check_branch
      %427 = sbr.rel (0) target = $region21
    $region20: #{tpu_custom_call.1} parent=1 // pred_region
      %s429 = ssub.s32 4096, 4096
      %430 = vsyncadd [#allocation4], %s429
      %s431 = sshll.u32 [#allocation5], 4
      %s432 = int_to_ptr.vmem [resolvable:$true] %s431
      %437 = dma.vmem_to_hbm [thread:$0]  %s432, 4096, %s3, [#allocation4], 256, 256, 16
    $region21: #{tpu_custom_call.1} parent=1 // pred_fallthru
      _
    // Predicated region
    $region22: #{tpu_custom_call.1} parent=1 // pred_check
      _
    $region23: #{tpu_custom_call.1} parent=1 // pred_check_branch
      %439 = sbr.rel (0) target = $region25
    $region24: #{tpu_custom_call.1} parent=1 // pred_region
      %440 = dma.done [#allocation4], 4096
    $region25: #{tpu_custom_call.1} parent=1 // pred_fallthru
      _
    %441 = vsyncpa [#allocation3], 1
    %442 = vsyncpa [#allocation4], 1

</llo_original>
